<compile_context>
chip_gen: v6e
topology: v6e:2x2x1
jax: 0.10.0
libtpu: 0.0.40
codegen_flags: <defaults>
</compile_context>

<pallas_src>
import functools

import jax
import jax.numpy as jnp
from jax.experimental import pallas as pl
from jax.experimental.pallas import tpu as pltpu


def _round_up(x, m):
    return -(-x // m) * m


def _rnn_seq_kernel(x_ref, h0_ref, wx_ref, wh_ref, b_ref,
                    act_ref, h_scr, *, hidden_size):
    """One grid step == one timestep.  h_scr carries h_{t-1} across steps."""
    # Initialise the carried hidden state on the first timestep only.
    @pl.when(pl.program_id(0) == 0)
    def _():
        h_scr[...] = h0_ref[...]

    x = x_ref[0]            # (B_pad, IN)
    h = h_scr[...]          # (B_pad, H)  == h_{t-1}

    # One fused pre-activation for BOTH gates:
    #   pre[:, :H]    -> new hidden (i2h)
    #   pre[:, H:H+O] -> output     (i2o)
    pre = (jnp.dot(x, wx_ref[...], preferred_element_type=jnp.float32)
           + jnp.dot(h, wh_ref[...], preferred_element_type=jnp.float32)
           + b_ref[...])
    act = jax.nn.sigmoid(pre)                      # lax.logistic -> EUP

    # Lane-dense (B_pad, 128) store of the full fused activation slab.
    act_ref[0] = act.astype(act_ref.dtype)

    # Update the carried hidden state AFTER both gates were computed from
    # h_{t-1}, preserving the PyTorch cell semantics.
    h_scr[...] = act[:, :hidden_size]


def prepare_params(w_i2h, b_i2h, w_i2o, b_i2o, input_size):
    """One-time transform of PyTorch-layout Linear params into kernel layout.

    Returns (wx, wh, b, hidden_size, output_size, n_pad) where
      wx: (input_size, n_pad)   -- input-part of [i2h | i2o], lane-padded
      wh: (hidden_size, n_pad)  -- hidden-part of [i2h | i2o], lane-padded
      b : (1, n_pad)
    so that  cat(x,h) @ cat(W_i2h, W_i2o).T + cat(b)  ==  x@wx + h@wh + b
    (restricted to the first hidden+output lanes).
    """
    hidden_size = w_i2h.shape[0]
    output_size = w_i2o.shape[0]
    n = hidden_size + output_size
    n_pad = _round_up(n, 128)

    wx = jnp.concatenate(
        [w_i2h[:, :input_size].T, w_i2o[:, :input_size].T], axis=1)  # (IN, n)
    wh = jnp.concatenate(
        [w_i2h[:, input_size:].T, w_i2o[:, input_size:].T], axis=1)  # (H, n)
    b = jnp.concatenate([b_i2h, b_i2o]).reshape(1, n)

    wx = jnp.pad(wx, ((0, 0), (0, n_pad - n)))
    wh = jnp.pad(wh, ((0, 0), (0, n_pad - n)))
    b = jnp.pad(b, ((0, 0), (0, n_pad - n)))
    return wx, wh, b, hidden_size, output_size, n_pad


def rnn_sequence(xs, h0, kernel_params):
    """Run the RNN cell over a whole sequence in ONE pallas_call.

    xs: (T, B, input_size) float32
    h0: (B, hidden_size) float32
    returns (outputs, hiddens): (T, B, output_size), (T, B, hidden_size)
    """
    wx, wh, b, hidden_size, output_size, n_pad = kernel_params
    T, B, input_size = xs.shape
    b_pad = _round_up(B, 8)

    xs_p = jnp.pad(xs, ((0, 0), (0, b_pad - B), (0, 0)))
    h0_p = jnp.pad(h0, ((0, b_pad - B), (0, 0)))

    flops = 2 * T * b_pad * (input_size + hidden_size) * n_pad
    bytes_accessed = 4 * ((input_size + hidden_size + 1) * n_pad
                          + T * b_pad * (input_size + n_pad))
    cost = pl.CostEstimate(flops=flops,
                           transcendentals=T * b_pad * n_pad,
                           bytes_accessed=bytes_accessed)

    acts = pl.pallas_call(
        functools.partial(_rnn_seq_kernel, hidden_size=hidden_size),
        out_shape=jax.ShapeDtypeStruct((T, b_pad, n_pad), jnp.float32),
        grid_spec=pltpu.PrefetchScalarGridSpec(
            num_scalar_prefetch=0,
            grid=(T,),
            in_specs=[
                # x streamed per timestep.
                pl.BlockSpec((1, b_pad, input_size), lambda t: (t, 0, 0)),
                # h0 / weights / bias: same block every step -> VMEM-resident.
                pl.BlockSpec((b_pad, hidden_size), lambda t: (0, 0)),
                pl.BlockSpec((input_size, n_pad), lambda t: (0, 0)),
                pl.BlockSpec((hidden_size, n_pad), lambda t: (0, 0)),
                pl.BlockSpec((1, n_pad), lambda t: (0, 0)),
            ],
            out_specs=pl.BlockSpec((1, b_pad, n_pad), lambda t: (t, 0, 0)),
            scratch_shapes=[pltpu.VMEM((b_pad, hidden_size), jnp.float32)],
        ),
        compiler_params=pltpu.CompilerParams(
            dimension_semantics=("arbitrary",)),  # recurrence -> sequential
        cost_estimate=cost,
    )(xs_p, h0_p, wx, wh, b)

    hiddens = acts[:, :B, :hidden_size]
    outputs = acts[:, :B, hidden_size:hidden_size + output_size]
    return outputs, hiddens


def rnn_cell(x, h, kernel_params):
    """Single-step forward matching RNN.forward(input_tensor, hidden_tensor)."""
    outputs, hiddens = rnn_sequence(x[None], h, kernel_params)
    return outputs[0], hiddens[0]


def init_params(key, input_size, hidden_size, output_size):
    """Deterministic init mimicking nn.Linear default (uniform +/- 1/sqrt(fan_in))."""
    fan_in = input_size + hidden_size
    bound = 1.0 / jnp.sqrt(jnp.float32(fan_in))
    k1, k2, k3, k4 = jax.random.split(key, 4)
    w_i2h = jax.random.uniform(k1, (hidden_size, fan_in), jnp.float32, -bound, bound)
    b_i2h = jax.random.uniform(k2, (hidden_size,), jnp.float32, -bound, bound)
    w_i2o = jax.random.uniform(k3, (output_size, fan_in), jnp.float32, -bound, bound)
    b_i2o = jax.random.uniform(k4, (output_size,), jnp.float32, -bound, bound)
    return w_i2h, b_i2h, w_i2o, b_i2o


def _ref_cell(x, h, w_i2h, b_i2h, w_i2o, b_i2o):
    combined = jnp.concatenate([x, h], axis=1)
    hid = jax.nn.sigmoid(combined @ w_i2h.T + b_i2h)
    out = jax.nn.sigmoid(combined @ w_i2o.T + b_i2o)
    return out, hid


if __name__ == "__main__":
    input_size, hidden_size, output_size = 16, 32, 8
    batch, seq_len = 2, 8

    key = jax.random.PRNGKey(0)
    kx, kh, kp = jax.random.split(key, 3)
    xs = jax.random.normal(kx, (seq_len, batch, input_size), jnp.float32)
    h0 = jax.random.normal(kh, (batch, hidden_size), jnp.float32)
    w_i2h, b_i2h, w_i2o, b_i2o = init_params(kp, input_size, hidden_size, output_size)

    # One-time parameter transform (hoisted out of the per-call path).
    kernel_params = prepare_params(w_i2h, b_i2h, w_i2o, b_i2o, input_size)

    # --- single-cell forward (exact module semantics) ---
    out1, hid1 = rnn_cell(xs[0], h0, kernel_params)
    jax.block_until_ready((out1, hid1))
    out1_ref, hid1_ref = _ref_cell(xs[0], h0, w_i2h, b_i2h, w_i2o, b_i2o)
    assert out1.shape == (batch, output_size) and hid1.shape == (batch, hidden_size)
    assert jnp.allclose(out1, out1_ref, atol=1e-5), "cell output mismatch"
    assert jnp.allclose(hid1, hid1_ref, atol=1e-5), "cell hidden mismatch"

    # --- fused sequence forward (one pallas_call over all T steps) ---
    outs, hids = rnn_sequence(xs, h0, kernel_params)
    jax.block_until_ready((outs, hids))

    h = h0
    outs_ref, hids_ref = [], []
    for t in range(seq_len):
        o, h = _ref_cell(xs[t], h, w_i2h, b_i2h, w_i2o, b_i2o)
        outs_ref.append(o)
        hids_ref.append(h)
    outs_ref = jnp.stack(outs_ref)
    hids_ref = jnp.stack(hids_ref)

    assert outs.shape == (seq_len, batch, output_size)
    assert hids.shape == (seq_len, batch, hidden_size)
    assert jnp.allclose(outs, outs_ref, atol=1e-5), "sequence output mismatch"
    assert jnp.allclose(hids, hids_ref, atol=1e-5), "sequence hidden mismatch"

    print("KERNEL_OK")
</pallas_src>

<mosaic_0001>
module attributes {stable_mosaic.version = 11 : i64} {
  func.func @_rnn_seq_kernel(%arg0: i32, %arg1: memref<1x8x16xf32, #tpu.memory_space<vmem>>, %arg2: memref<8x32xf32, #tpu.memory_space<vmem>>, %arg3: memref<16x128xf32, #tpu.memory_space<vmem>>, %arg4: memref<32x128xf32, #tpu.memory_space<vmem>>, %arg5: memref<1x128xf32, #tpu.memory_space<vmem>>, %arg6: memref<1x8x128xf32, #tpu.memory_space<vmem>>, %arg7: memref<8x32xf32, #tpu.memory_space<vmem>>) attributes {dimension_semantics = [#tpu.dimension_semantics<arbitrary>], iteration_bounds = array<i64: 1>, scalar_prefetch = 0 : i64, scratch_operands = 1 : i64, tpu.core_type = #tpu.core_type<tc>, window_params = [{transform_indices = @transform_0, window_bounds = array<i64: 1, 8, 16>}, {pipeline_mode = #tpu.pipeline_mode<synchronous>, transform_indices = @transform_1, window_bounds = array<i64: 8, 32>}, {pipeline_mode = #tpu.pipeline_mode<synchronous>, transform_indices = @transform_2, window_bounds = array<i64: 16, 128>}, {pipeline_mode = #tpu.pipeline_mode<synchronous>, transform_indices = @transform_3, window_bounds = array<i64: 32, 128>}, {pipeline_mode = #tpu.pipeline_mode<synchronous>, transform_indices = @transform_4, window_bounds = array<i64: 1, 128>}, {transform_indices = @transform_5, window_bounds = array<i64: 1, 8, 128>}]} {
    %c0_i32 = arith.constant 0 : i32
    %0 = arith.cmpi eq, %arg0, %c0_i32 : i32
    %1 = arith.extui %0 : i1 to i32
    %c0_i32_0 = arith.constant 0 : i32
    %2 = arith.cmpi ne, %1, %c0_i32_0 : i32
    scf.if %2 {
      %c0_18 = arith.constant 0 : index
      %c0_19 = arith.constant 0 : index
      %24 = vector.load %arg2[%c0_18, %c0_19] : memref<8x32xf32, #tpu.memory_space<vmem>>, vector<8x32xf32>
      %c0_20 = arith.constant 0 : index
      %c0_21 = arith.constant 0 : index
      %25 = vector.load %arg7[%c0_20, %c0_21] : memref<8x32xf32, #tpu.memory_space<vmem>>, vector<8x32xf32>
      tpu.vector_store %arg7[%c0_20, %c0_21], %24 {strides = array<i32>} : memref<8x32xf32, #tpu.memory_space<vmem>>, vector<8x32xf32>,
    } else {
    }
    %c0 = arith.constant 0 : index
    %c0_1 = arith.constant 0 : index
    %c0_2 = arith.constant 0 : index
    %3 = vector.load %arg1[%c0, %c0_1, %c0_2] : memref<1x8x16xf32, #tpu.memory_space<vmem>>, vector<1x8x16xf32>
    %4 = vector.shape_cast %3 : vector<1x8x16xf32> to vector<8x16xf32>
    %c0_3 = arith.constant 0 : index
    %c0_4 = arith.constant 0 : index
    %5 = vector.load %arg7[%c0_3, %c0_4] : memref<8x32xf32, #tpu.memory_space<vmem>>, vector<8x32xf32>
    %c0_5 = arith.constant 0 : index
    %c0_6 = arith.constant 0 : index
    %6 = vector.load %arg3[%c0_5, %c0_6] : memref<16x128xf32, #tpu.memory_space<vmem>>, vector<16x128xf32>
    %cst = arith.constant dense<0.000000e+00> : vector<8x128xf32>
    %7 = tpu.matmul %4, %6, %cst {dimension_numbers = #tpu.dot_dimension_numbers<[1], [0], [0], [1], [0, 0, 1, 1], [], []>} : vector<8x16xf32>, vector<16x128xf32>, vector<8x128xf32> -> vector<8x128xf32>
    %c0_7 = arith.constant 0 : index
    %c0_8 = arith.constant 0 : index
    %8 = vector.load %arg4[%c0_7, %c0_8] : memref<32x128xf32, #tpu.memory_space<vmem>>, vector<32x128xf32>
    %cst_9 = arith.constant dense<0.000000e+00> : vector<8x128xf32>
    %9 = tpu.matmul %5, %8, %cst_9 {dimension_numbers = #tpu.dot_dimension_numbers<[1], [0], [0], [1], [0, 0, 1, 1], [], []>} : vector<8x32xf32>, vector<32x128xf32>, vector<8x128xf32> -> vector<8x128xf32>
    %10 = arith.addf %7, %9 : vector<8x128xf32>
    %c0_10 = arith.constant 0 : index
    %c0_11 = arith.constant 0 : index
    %11 = vector.load %arg5[%c0_10, %c0_11] : memref<1x128xf32, #tpu.memory_space<vmem>>, vector<1x128xf32>
    %12 = vector.broadcast %11 : vector<1x128xf32> to vector<8x128xf32>
    %13 = arith.addf %10, %12 : vector<8x128xf32>
    %14 = arith.negf %13 : vector<8x128xf32>
    %15 = math.exp %14 : vector<8x128xf32>
    %cst_12 = arith.constant 1.000000e+00 : f32
    %16 = vector.broadcast %cst_12 : f32 to vector<8x128xf32>
    %17 = arith.addf %16, %15 : vector<8x128xf32>
    %18 = arith.divf %16, %17 : vector<8x128xf32>
    %c0_13 = arith.constant 0 : index
    %c0_14 = arith.constant 0 : index
    %c0_15 = arith.constant 0 : index
    %19 = vector.load %arg6[%c0_13, %c0_14, %c0_15] : memref<1x8x128xf32, #tpu.memory_space<vmem>>, vector<1x8x128xf32>
    %20 = vector.shape_cast %19 : vector<1x8x128xf32> to vector<8x128xf32>
    %21 = vector.shape_cast %18 : vector<8x128xf32> to vector<1x8x128xf32>
    tpu.vector_store %arg6[%c0_13, %c0_14, %c0_15], %21 {strides = array<i32>} : memref<1x8x128xf32, #tpu.memory_space<vmem>>, vector<1x8x128xf32>,
    %22 = vector.extract_strided_slice %18 {offsets = [0, 0], sizes = [8, 32], strides = [1, 1]} : vector<8x128xf32> to vector<8x32xf32>
    %c0_16 = arith.constant 0 : index
    %c0_17 = arith.constant 0 : index
    %23 = vector.load %arg7[%c0_16, %c0_17] : memref<8x32xf32, #tpu.memory_space<vmem>>, vector<8x32xf32>
    tpu.vector_store %arg7[%c0_16, %c0_17], %22 {strides = array<i32>} : memref<8x32xf32, #tpu.memory_space<vmem>>, vector<8x32xf32>,
    return
  }
  func.func @transform_0(%arg0: i32) -> (i32, i32, i32) {
    %c0_i32 = arith.constant 0 : i32
    %c0_i32_0 = arith.constant 0 : i32
    %c0_i32_1 = arith.constant 0 : i32
    return %arg0, %c0_i32, %c0_i32_0 : i32, i32, i32
  }
  func.func @transform_1(%arg0: i32) -> (i32, i32) {
    %c0_i32 = arith.constant 0 : i32
    %c0_i32_0 = arith.constant 0 : i32
    %c0_i32_1 = arith.constant 0 : i32
    return %c0_i32, %c0_i32_0 : i32, i32
  }
  func.func @transform_2(%arg0: i32) -> (i32, i32) {
    %c0_i32 = arith.constant 0 : i32
    %c0_i32_0 = arith.constant 0 : i32
    %c0_i32_1 = arith.constant 0 : i32
    return %c0_i32, %c0_i32_0 : i32, i32
  }
  func.func @transform_3(%arg0: i32) -> (i32, i32) {
    %c0_i32 = arith.constant 0 : i32
    %c0_i32_0 = arith.constant 0 : i32
    %c0_i32_1 = arith.constant 0 : i32
    return %c0_i32, %c0_i32_0 : i32, i32
  }
  func.func @transform_4(%arg0: i32) -> (i32, i32) {
    %c0_i32 = arith.constant 0 : i32
    %c0_i32_0 = arith.constant 0 : i32
    %c0_i32_1 = arith.constant 0 : i32
    return %c0_i32, %c0_i32_0 : i32, i32
  }
  func.func @transform_5(%arg0: i32) -> (i32, i32, i32) {
    %c0_i32 = arith.constant 0 : i32
    %c0_i32_0 = arith.constant 0 : i32
    %c0_i32_1 = arith.constant 0 : i32
    return %arg0, %c0_i32, %c0_i32_0 : i32, i32, i32
  }
}

</mosaic_0001>

<llo_original>
// kernel: tpu_custom_call.1
$region0: #{tpu_custom_call.1}
  #allocation0 [shape = 'u32[]', space=smem, size = 0x4, offset = 0x4, fixed_abs, tag = 'smem constant byte address 0x4 - core index']
  #allocation1 [shape = 'u32[144,128]{1,0:T(1,128)}', space=vmem, size = 0x12000, scoped, tag = 'internal scratch']
  #allocation2 [shape = 'f32[8,32]{1,0:T(8,128)}', space=vmem, size = 0x1000, scoped, tag = 'scratch operand']
  %s0 = inlined_call_operand.hbm [shape: f32[1,8,16], index: 0, kind: input, shape index: {}]
  %s1 = inlined_call_operand.hbm [shape: f32[8,32], index: 1, kind: input, shape index: {}]
  %s2 = inlined_call_operand.hbm [shape: f32[16,128], index: 2, kind: input, shape index: {}]
  %s3 = inlined_call_operand.hbm [shape: f32[32,128], index: 3, kind: input, shape index: {}]
  %s4 = inlined_call_operand.vmem [shape: f32[1,128], index: 4, kind: input, shape index: {}]
  %s5 = inlined_call_operand.hbm [shape: f32[1,8,128], index: 5, kind: output, shape index: {}]
  %s6 = sld [smem:[#allocation0]]
  $region50: #{tpu_custom_call.1} parent=0
    _
  %s8 = ssub.s32 1, %s6
  %s9 = scalar_select 0, %s8, %s6
  $region1: #{tpu_custom_call.1} parent=0
    #allocation3 [shape = 'u8[4096]{0}', space=vmem, size = 0x1000, scoped, tag = 'input window, operand 0, single buffered']
    #allocation4 [shape = 's32[1]{0}', space=sflag, size = 0x4, scoped, tag = 'scoped memory for tpu_custom_call.1']
    #allocation5 [shape = 's32[1]{0}', space=sflag, size = 0x4, scoped, tag = 'scoped memory for tpu_custom_call.1']
    #allocation6 [shape = 'u8[4096]{0}', space=vmem, size = 0x1000, scoped, tag = 'input window, operand 1, single buffered']
    #allocation7 [shape = 's32[1]{0}', space=sflag, size = 0x4, scoped, tag = 'scoped memory for tpu_custom_call.1']
    #allocation8 [shape = 'u8[8192]{0}', space=vmem, size = 0x2000, scoped, tag = 'input window, operand 2, single buffered']
    #allocation9 [shape = 'u8[16384]{0}', space=vmem, size = 0x4000, scoped, tag = 'input window, operand 3, single buffered']
    #allocation10 [shape = 's32[1]{0}', space=sflag, size = 0x4, scoped, tag = 'scoped memory for tpu_custom_call.1']
    #allocation11 [shape = 'u8[4096]{0}', space=vmem, size = 0x1000, scoped, tag = 'output window, operand 0, single buffered']
    %10 = vsyncpa [#allocation4], 0
    %11 = vsyncpa [#allocation7], 0
    %12 = vsyncpa [#allocation10], 0
    %13 = vsyncpa [#allocation5], 0
    // Predicated region
    $region2: #{tpu_custom_call.1} parent=1 // pred_check
      _
    $region3: #{tpu_custom_call.1} parent=1 // pred_check_branch
      %15 = sbr.rel (0) target = $region5
    $region4: #{tpu_custom_call.1} parent=1 // pred_region
      %s17 = ssub.s32 128, 128
      %18 = vsyncadd [#allocation4], %s17
      %s20 = sshll.u32 [#allocation3], 4
      %s21 = int_to_ptr.vmem [resolvable:$true] %s20
      %23 = dma.hbm_to_vmem [thread:$0]  %s0, 128, %s21, [#allocation4]
    $region5: #{tpu_custom_call.1} parent=1 // pred_fallthru
      _
    // Predicated region
    $region6: #{tpu_custom_call.1} parent=1 // pred_check
      _
    $region7: #{tpu_custom_call.1} parent=1 // pred_check_branch
      %25 = sbr.rel (0) target = $region9
    $region8: #{tpu_custom_call.1} parent=1 // pred_region
      %s27 = ssub.s32 128, 128
      %28 = vsyncadd [#allocation7], %s27
      %s30 = sshll.u32 [#allocation6], 4
      %s31 = int_to_ptr.vmem [resolvable:$true] %s30
      %33 = dma.hbm_to_vmem [thread:$0]  %s1, 128, %s31, [#allocation7]
    $region9: #{tpu_custom_call.1} parent=1 // pred_fallthru
      _
    // Predicated region
    $region10: #{tpu_custom_call.1} parent=1 // pred_check
      _
    $region11: #{tpu_custom_call.1} parent=1 // pred_check_branch
      %35 = sbr.rel (0) target = $region13
    $region12: #{tpu_custom_call.1} parent=1 // pred_region
      %s37 = ssub.s32 256, 256
      %38 = vsyncadd [#allocation7], %s37
      %s39 = sshll.u32 [#allocation8], 4
      %s40 = int_to_ptr.vmem [resolvable:$true] %s39
      %45 = dma.hbm_to_vmem [thread:$0]  %s2, 256, %s40, [#allocation7], 128, 128, 8
    $region13: #{tpu_custom_call.1} parent=1 // pred_fallthru
      _
    // Predicated region
    $region14: #{tpu_custom_call.1} parent=1 // pred_check
      _
    $region15: #{tpu_custom_call.1} parent=1 // pred_check_branch
      %47 = sbr.rel (0) target = $region17
    $region16: #{tpu_custom_call.1} parent=1 // pred_region
      %s49 = ssub.s32 512, 512
      %50 = vsyncadd [#allocation10], %s49
      %s51 = sshll.u32 [#allocation9], 4
      %s52 = int_to_ptr.vmem [resolvable:$true] %s51
      %57 = dma.hbm_to_vmem [thread:$0]  %s3, 512, %s52, [#allocation10], 128, 128, 8
    $region17: #{tpu_custom_call.1} parent=1 // pred_fallthru
      _
    // Predicated region
    $region18: #{tpu_custom_call.1} parent=1 // pred_check
      _
    $region19: #{tpu_custom_call.1} parent=1 // pred_check_branch
      %59 = sbr.rel (0) target = $region21
    $region20: #{tpu_custom_call.1} parent=1 // pred_region
      _
    $region21: #{tpu_custom_call.1} parent=1 // pred_fallthru
      _
    // Predicated region
    $region22: #{tpu_custom_call.1} parent=1 // pred_check
      _
    $region23: #{tpu_custom_call.1} parent=1 // pred_check_branch
      %61 = sbr.rel (0) target = $region25
    $region24: #{tpu_custom_call.1} parent=1 // pred_region
      %62 = dma.done [#allocation4], 128
    $region25: #{tpu_custom_call.1} parent=1 // pred_fallthru
      _
    // Predicated region
    $region26: #{tpu_custom_call.1} parent=1 // pred_check
      _
    $region27: #{tpu_custom_call.1} parent=1 // pred_check_branch
      %64 = sbr.rel (0) target = $region29
    $region28: #{tpu_custom_call.1} parent=1 // pred_region
      %65 = dma.done [#allocation7], 128
    $region29: #{tpu_custom_call.1} parent=1 // pred_fallthru
      _
    // Predicated region
    $region30: #{tpu_custom_call.1} parent=1 // pred_check
      _
    $region31: #{tpu_custom_call.1} parent=1 // pred_check_branch
      %67 = sbr.rel (0) target = $region33
    $region32: #{tpu_custom_call.1} parent=1 // pred_region
      %68 = dma.done [#allocation7], 256
    $region33: #{tpu_custom_call.1} parent=1 // pred_fallthru
      _
    // Predicated region
    $region34: #{tpu_custom_call.1} parent=1 // pred_check
      _
    $region35: #{tpu_custom_call.1} parent=1 // pred_check_branch
      %70 = sbr.rel (0) target = $region37
    $region36: #{tpu_custom_call.1} parent=1 // pred_region
      %71 = dma.done [#allocation10], 512
    $region37: #{tpu_custom_call.1} parent=1 // pred_fallthru
      _
    %p72 = scmp.eq.s32.totalorder 0, 0
    // Predicated region
    $region38: #{tpu_custom_call.1} parent=1 // pred_check
      %p73 = pneg %p72
    $region39: #{tpu_custom_call.1} parent=1 // pred_check_branch
      %75 = sbr.rel (%p73) target = $region41
    $region40: #{tpu_custom_call.1} parent=1 // pred_region
      %v76 = vld [vmem:[#allocation6] sm:$0xff]
      %vm77 = vcmask 261120
      %78 = vst.msk [vmem:[#allocation2] sm:$0xff] %vm77, %v76
    $region41: #{tpu_custom_call.1} parent=1 // pred_fallthru
      _
    %v79 = vld [vmem:[#allocation3] sm:$0xff]
    %v80 = vld [vmem:[#allocation2] sm:$0xff]
    %v81 = vld [vmem:[#allocation8] sm:$0xff]
    %v82 = vld [vmem:[#allocation8 + $0x8] sm:$0xff]
    %v83 = vld [vmem:[#allocation9] sm:$0xff]
    %v84 = vld [vmem:[#allocation9 + $0x8] sm:$0xff]
    %v85 = vld [vmem:[#allocation9 + $0x10] sm:$0xff]
    %v86 = vld [vmem:[#allocation9 + $0x18] sm:$0xff]
    %vm87 = vcmask 261120
    %v89 = vsel %vm87, %v80, 0
    %91 = vmatprep.subr.mxu0 0.0
    %92 = vmatpush1.msra.mxu0 0.0
    %93 = vmatprep.subr.mxu0 0.0
    %94 = vmatpush1.msra.mxu0 0.0
    %95 = vmatprep.subr.mxu0 0.0
    %96 = vmatpush1.msra.mxu0 0.0
    %97 = vmatprep.subr.mxu0 0.0
    %98 = vmatpush1.msra.mxu0 0.0
    %99 = vmatprep.subr.mxu0 0.0
    %100 = vmatpush1.msra.mxu0 0.0
    %101 = vmatprep.subr.mxu0 0.0
    %102 = vmatpush1.msra.mxu0 0.0
    %103 = vmatprep.subr.mxu0 0.0
    %104 = vmatpush1.msra.mxu0 0.0
    %105 = vmatprep.subr.mxu0 0.0
    %106 = vmatpush1.msra.mxu0 0.0
    %107 = vmatprep.subr.mxu0 0.0
    %108 = vmatpush1.msra.mxu0 0.0
    %109 = vmatprep.subr.mxu0 0.0
    %110 = vmatpush1.msra.mxu0 0.0
    %111 = vmatprep.subr.mxu0 0.0
    %112 = vmatpush1.msra.mxu0 0.0
    %113 = vmatprep.subr.mxu0 0.0
    %114 = vmatpush1.msra.mxu0 0.0
    %115 = vmatprep.subr.mxu0 0.0
    %116 = vmatpush1.msra.mxu0 %v86
    %117 = vmatprep.subr.mxu0 0.0
    %118 = vmatpush1.msra.mxu0 %v85
    %119 = vmatprep.subr.mxu0 0.0
    %120 = vmatpush1.msra.mxu0 %v84
    %121 = vmatprep.subr.mxu0 0.0
    %122 = vmatpush1.msra.mxu0 %v83
    %123 = vmatprep.subr.mxu0 0.0
    %124 = vmatpush2.msra.mxu0 0.0
    %125 = vmatprep.subr.mxu0 0.0
    %126 = vmatpush2.msra.mxu0 0.0
    %127 = vmatprep.subr.mxu0 0.0
    %128 = vmatpush2.msra.mxu0 0.0
    %129 = vmatprep.subr.mxu0 0.0
    %130 = vmatpush2.msra.mxu0 0.0
    %131 = vmatprep.subr.mxu0 0.0
    %132 = vmatpush2.msra.mxu0 0.0
    %133 = vmatprep.subr.mxu0 0.0
    %134 = vmatpush2.msra.mxu0 0.0
    %135 = vmatprep.subr.mxu0 0.0
    %136 = vmatpush2.msra.mxu0 0.0
    %137 = vmatprep.subr.mxu0 0.0
    %138 = vmatpush2.msra.mxu0 0.0
    %139 = vmatprep.subr.mxu0 0.0
    %140 = vmatpush2.msra.mxu0 0.0
    %141 = vmatprep.subr.mxu0 0.0
    %142 = vmatpush2.msra.mxu0 0.0
    %143 = vmatprep.subr.mxu0 0.0
    %144 = vmatpush2.msra.mxu0 0.0
    %145 = vmatprep.subr.mxu0 0.0
    %146 = vmatpush2.msra.mxu0 0.0
    %147 = vmatprep.subr.mxu0 0.0
    %148 = vmatpush2.msra.mxu0 0.0
    %149 = vmatprep.subr.mxu0 0.0
    %150 = vmatpush2.msra.mxu0 0.0
    %151 = vmatprep.subr.mxu0 0.0
    %152 = vmatpush2.msra.mxu0 0.0
    %153 = vmatprep.subr.mxu0 0.0
    %154 = vmatpush2.msra.mxu0 0.0
    %155 = vmatprep.mubr.f32.mxu0 0.0
    %156 = vmatmul.mubr.f32.gmra.mxu0 %v89
    %v157 = vpop.f32.mrf.mxu0
    %v158 = vadd.f32 0.0, %v157
    %v159 = vpop.f32.mrf.mxu0
    %160 = vdwg.mxu0
    %vm161 = vcmask 130048
    %v163 = vsel %vm161, %v79, 0
    %165 = vmatprep.subr.mxu0 0.0
    %166 = vmatpush1.msra.mxu0 0.0
    %167 = vmatprep.subr.mxu0 0.0
    %168 = vmatpush1.msra.mxu0 0.0
    %169 = vmatprep.subr.mxu0 0.0
    %170 = vmatpush1.msra.mxu0 0.0
    %171 = vmatprep.subr.mxu0 0.0
    %172 = vmatpush1.msra.mxu0 0.0
    %173 = vmatprep.subr.mxu0 0.0
    %174 = vmatpush1.msra.mxu0 0.0
    %175 = vmatprep.subr.mxu0 0.0
    %176 = vmatpush1.msra.mxu0 0.0
    %177 = vmatprep.subr.mxu0 0.0
    %178 = vmatpush1.msra.mxu0 0.0
    %179 = vmatprep.subr.mxu0 0.0
    %180 = vmatpush1.msra.mxu0 0.0
    %181 = vmatprep.subr.mxu0 0.0
    %182 = vmatpush1.msra.mxu0 0.0
    %183 = vmatprep.subr.mxu0 0.0
    %184 = vmatpush1.msra.mxu0 0.0
    %185 = vmatprep.subr.mxu0 0.0
    %186 = vmatpush1.msra.mxu0 0.0
    %187 = vmatprep.subr.mxu0 0.0
    %188 = vmatpush1.msra.mxu0 0.0
    %189 = vmatprep.subr.mxu0 0.0
    %190 = vmatpush1.msra.mxu0 0.0
    %191 = vmatprep.subr.mxu0 0.0
    %192 = vmatpush1.msra.mxu0 0.0
    %193 = vmatprep.subr.mxu0 0.0
    %194 = vmatpush1.msra.mxu0 %v82
    %195 = vmatprep.subr.mxu0 0.0
    %196 = vmatpush1.msra.mxu0 %v81
    %197 = vmatprep.subr.mxu0 0.0
    %198 = vmatpush2.msra.mxu0 0.0
    %199 = vmatprep.subr.mxu0 0.0
    %200 = vmatpush2.msra.mxu0 0.0
    %201 = vmatprep.subr.mxu0 0.0
    %202 = vmatpush2.msra.mxu0 0.0
    %203 = vmatprep.subr.mxu0 0.0
    %204 = vmatpush2.msra.mxu0 0.0
    %205 = vmatprep.subr.mxu0 0.0
    %206 = vmatpush2.msra.mxu0 0.0
    %207 = vmatprep.subr.mxu0 0.0
    %208 = vmatpush2.msra.mxu0 0.0
    %209 = vmatprep.subr.mxu0 0.0
    %210 = vmatpush2.msra.mxu0 0.0
    %211 = vmatprep.subr.mxu0 0.0
    %212 = vmatpush2.msra.mxu0 0.0
    %213 = vmatprep.subr.mxu0 0.0
    %214 = vmatpush2.msra.mxu0 0.0
    %215 = vmatprep.subr.mxu0 0.0
    %216 = vmatpush2.msra.mxu0 0.0
    %217 = vmatprep.subr.mxu0 0.0
    %218 = vmatpush2.msra.mxu0 0.0
    %219 = vmatprep.subr.mxu0 0.0
    %220 = vmatpush2.msra.mxu0 0.0
    %221 = vmatprep.subr.mxu0 0.0
    %222 = vmatpush2.msra.mxu0 0.0
    %223 = vmatprep.subr.mxu0 0.0
    %224 = vmatpush2.msra.mxu0 0.0
    %225 = vmatprep.subr.mxu0 0.0
    %226 = vmatpush2.msra.mxu0 0.0
    %227 = vmatprep.subr.mxu0 0.0
    %228 = vmatpush2.msra.mxu0 0.0
    %229 = vmatprep.mubr.f32.mxu0 0.0
    %230 = vmatmul.mubr.f32.gmra.mxu0 %v163
    %v231 = vpop.f32.mrf.mxu0
    %v232 = vadd.f32 %v158, %v231
    %v233 = vpop.f32.mrf.mxu0
    %234 = vdwg.mxu0
    %v235 = vld [vmem:[%s4] sm:$0x1]
    %v237 = vlaneseq
    %v238 = vshrl.u32 %v237, 7
    %v239 = vsub.s32 0, %v238
    %v240 = vrot.slane %v235, %v239
    %v242 = vadd.f32 %v232, %v240
    %v243 = vxor.u32 %v242, 2147483648
    %v244 = vmul.f32 %v243, 1.442695
    %v245 = vpow.pop %v244
    %v246 = vadd.f32 %v245, 1.0
    %v247 = vrcp.pop %v246
    %v248 = vmul.f32 1.0, %v247
    %249 = vst [vmem:[#allocation11] sm:$0xff] %v248
    %250 = vst.msk [vmem:[#allocation2] sm:$0xff] %vm87, %v248
    // Predicated region
    $region42: #{tpu_custom_call.1} parent=1 // pred_check
      _
    $region43: #{tpu_custom_call.1} parent=1 // pred_check_branch
      %252 = sbr.rel (0) target = $region45
    $region44: #{tpu_custom_call.1} parent=1 // pred_region
      %s254 = ssub.s32 128, 128
      %255 = vsyncadd [#allocation5], %s254
      %s257 = sshll.u32 [#allocation11], 4
      %s258 = int_to_ptr.vmem [resolvable:$true] %s257
      %260 = dma.vmem_to_hbm [thread:$0]  %s258, 128, %s5, [#allocation5]
    $region45: #{tpu_custom_call.1} parent=1 // pred_fallthru
      _
    // Predicated region
    $region46: #{tpu_custom_call.1} parent=1 // pred_check
      _
    $region47: #{tpu_custom_call.1} parent=1 // pred_check_branch
      %262 = sbr.rel (0) target = $region49
    $region48: #{tpu_custom_call.1} parent=1 // pred_region
      %263 = dma.done [#allocation5], 128
    $region49: #{tpu_custom_call.1} parent=1 // pred_fallthru
      _
    %264 = vsyncpa [#allocation4], 1
    %265 = vsyncpa [#allocation7], 1
    %266 = vsyncpa [#allocation10], 1
    %267 = vsyncpa [#allocation5], 1

</llo_original>
